<compile_context>
chip_gen: v5e
topology: v5e:2x2
jax: 0.10.0
libtpu: 0.0.40
codegen_flags: <defaults>
</compile_context>

<pallas_src>
import numpy as np
import jax
import jax.numpy as jnp
from jax.experimental import pallas as pl
from jax.experimental.pallas import tpu as pltpu

PROB = 0.2  # module hardcodes 0.2 in forward

# Integer thresholds on raw uint32 bits (bits * 2^-32 ~ U[0,1)):
#   bits <  LO  <=>  noise < prob/2        (prob/2     = 0.1)
#   bits >  HI  <=>  noise > 1 - prob/2    (1 - prob/2 = 0.9)
_LO_U32 = 429496730      # = ceil(0.1 * 2**32)
_HI_U32 = 3865470566     # = floor(0.9 * 2**32)

_LANE = 512              # lane-dense tiles: last dim multiple of 128


def _salt_and_pepper_kernel(sp_ref, x_ref, noise_ref, o_ref):
    # sp_ref:    SMEM (2,)  float32  -> [salt, pepper]
    # x_ref:     VMEM (block_rows, LANE) float32
    # noise_ref: VMEM (block_rows, LANE) uint32
    salt = sp_ref[0]
    pepper = sp_ref[1]

    x = x_ref[...]
    bits = noise_ref[...]

    lo = jnp.asarray(_LO_U32, dtype=jnp.uint32)
    hi = jnp.asarray(_HI_U32, dtype=jnp.uint32)

    y = jnp.where(bits < lo, salt, x)
    y = jnp.where(bits > hi, pepper, y)
    o_ref[...] = y.astype(o_ref.dtype)


def salt_and_pepper(x, seed):
    """x: (B, C, H, W) float32 (NCHW). seed: python int / int32 scalar."""
    orig_shape = x.shape
    n = int(np.prod(orig_shape))
    itemsize = jnp.dtype(x.dtype).itemsize

    # Global reductions in the wrapper (XLA is already at HBM roofline here).
    salt = jnp.max(x)
    pepper = jnp.min(x)
    sp = jnp.stack([salt, pepper]).astype(x.dtype)  # (2,) -> SMEM scalars

    # Flatten to a lane-dense 2-D slab (last dim = 512), pad rows up to the
    # block size.  Padded tail is discarded after the call; salt/pepper come
    # from the original x so padding cannot affect results.
    rows = -(-n // _LANE)
    block_rows = min(256, ((rows + 7) // 8) * 8)          # multiple of 8
    rows_padded = ((rows + block_rows - 1) // block_rows) * block_rows
    padded = rows_padded * _LANE

    xf = x.reshape(-1)
    if padded != n:
        xf = jnp.pad(xf, (0, padded - n))
    x2 = xf.reshape(rows_padded, _LANE)

    # Uniform noise as raw uint32 bits (one value per element).
    key = jax.random.PRNGKey(seed)
    noise = jax.random.bits(key, (rows_padded, _LANE), dtype=jnp.uint32)

    grid = (rows_padded // block_rows,)
    bytes_accessed = 2 * padded * itemsize + padded * 4    # x in/out + noise

    out2 = pl.pallas_call(
        _salt_and_pepper_kernel,
        out_shape=jax.ShapeDtypeStruct((rows_padded, _LANE), x.dtype),
        grid=grid,
        in_specs=[
            pl.BlockSpec(memory_space=pltpu.SMEM),                    # [salt, pepper]
            pl.BlockSpec((block_rows, _LANE), lambda i: (i, 0)),      # x tile
            pl.BlockSpec((block_rows, _LANE), lambda i: (i, 0)),      # noise tile
        ],
        out_specs=pl.BlockSpec((block_rows, _LANE), lambda i: (i, 0)),
        input_output_aliases={1: 0},          # op is semantically in-place on x
        compiler_params=pltpu.CompilerParams(
            dimension_semantics=("parallel",)),
        cost_estimate=pl.CostEstimate(
            flops=4 * padded, transcendentals=0, bytes_accessed=bytes_accessed),
    )(sp, x2, noise)

    return out2.reshape(-1)[:n].reshape(orig_shape)


if __name__ == "__main__":
    key = jax.random.PRNGKey(0)
    x = jax.random.normal(key, (2, 4, 16, 16), dtype=jnp.float32)

    y = salt_and_pepper(x, seed=1234)
    y = jax.block_until_ready(y)

    # Light sanity checks: shape/dtype preserved, values stay inside the
    # original [min, max] range (salt = max(x), pepper = min(x)).
    assert y.shape == x.shape and y.dtype == x.dtype
    assert float(jnp.max(y)) <= float(jnp.max(x)) + 1e-6
    assert float(jnp.min(y)) >= float(jnp.min(x)) - 1e-6

    print("KERNEL_OK")
</pallas_src>

<mosaic_0001>
module attributes {stable_mosaic.version = 11 : i64} {
  func.func @_salt_and_pepper_kernel(%arg0: i32, %arg1: memref<2xf32, #tpu.memory_space<smem>>, %arg2: memref<8x512xf32, #tpu.memory_space<vmem>>, %arg3: memref<8x512xi32, #tpu.memory_space<vmem>>, %arg4: memref<8x512xf32, #tpu.memory_space<vmem>>) attributes {dimension_semantics = [#tpu.dimension_semantics<parallel>], iteration_bounds = array<i64: 1>, scalar_prefetch = 0 : i64, scratch_operands = 0 : i64, tpu.core_type = #tpu.core_type<tc>, window_params = [{transform_indices = @transform_0, window_bounds = array<i64: 2>}, {transform_indices = @transform_1, window_bounds = array<i64: 8, 512>}, {transform_indices = @transform_2, window_bounds = array<i64: 8, 512>}, {transform_indices = @transform_3, window_bounds = array<i64: 8, 512>}]} {
    %c0 = arith.constant 0 : index
    %0 = memref.load %arg1[%c0] : memref<2xf32, #tpu.memory_space<smem>>
    %c1 = arith.constant 1 : index
    %1 = memref.load %arg1[%c1] : memref<2xf32, #tpu.memory_space<smem>>
    %c0_0 = arith.constant 0 : index
    %c0_1 = arith.constant 0 : index
    %2 = vector.load %arg2[%c0_0, %c0_1] : memref<8x512xf32, #tpu.memory_space<vmem>>, vector<8x512xf32>
    %c0_2 = arith.constant 0 : index
    %c0_3 = arith.constant 0 : index
    %3 = vector.load %arg3[%c0_2, %c0_3] : memref<8x512xi32, #tpu.memory_space<vmem>>, vector<8x512xi32>
    %c429496730_i32 = arith.constant 429496730 : i32
    %4 = vector.broadcast %c429496730_i32 : i32 to vector<8x512xi32>
    %5 = arith.cmpi ult, %3, %4 : vector<8x512xi32>
    %6 = vector.broadcast %0 : f32 to vector<8x512xf32>
    %7 = arith.select %5, %6, %2 : vector<8x512xi1>, vector<8x512xf32>
    %c-429496730_i32 = arith.constant -429496730 : i32
    %8 = vector.broadcast %c-429496730_i32 : i32 to vector<8x512xi32>
    %9 = arith.cmpi ugt, %3, %8 : vector<8x512xi32>
    %10 = vector.broadcast %1 : f32 to vector<8x512xf32>
    %11 = arith.select %9, %10, %7 : vector<8x512xi1>, vector<8x512xf32>
    %c0_4 = arith.constant 0 : index
    %c0_5 = arith.constant 0 : index
    %12 = vector.load %arg4[%c0_4, %c0_5] : memref<8x512xf32, #tpu.memory_space<vmem>>, vector<8x512xf32>
    tpu.vector_store %arg4[%c0_4, %c0_5], %11 {strides = array<i32>} : memref<8x512xf32, #tpu.memory_space<vmem>>, vector<8x512xf32>,
    return
  }
  func.func @transform_0(%arg0: i32) -> i32 {
    %c0_i32 = arith.constant 0 : i32
    %c0_i32_0 = arith.constant 0 : i32
    return %c0_i32 : i32
  }
  func.func @transform_1(%arg0: i32) -> (i32, i32) {
    %c0_i32 = arith.constant 0 : i32
    %c0_i32_0 = arith.constant 0 : i32
    return %arg0, %c0_i32 : i32, i32
  }
  func.func @transform_2(%arg0: i32) -> (i32, i32) {
    %c0_i32 = arith.constant 0 : i32
    %c0_i32_0 = arith.constant 0 : i32
    return %arg0, %c0_i32 : i32, i32
  }
  func.func @transform_3(%arg0: i32) -> (i32, i32) {
    %c0_i32 = arith.constant 0 : i32
    %c0_i32_0 = arith.constant 0 : i32
    return %arg0, %c0_i32 : i32, i32
  }
}

</mosaic_0001>

<llo_original>
// kernel: tpu_custom_call.1
$region0: #{tpu_custom_call.1}
  #allocation0 [shape = 'u32[]', space=smem, size = 0x4, offset = 0x4, fixed_abs, tag = 'smem constant byte address 0x4 - core index']
  #allocation1 [shape = 'u32[72,128]{1,0:T(1,128)}', space=vmem, size = 0x9000, scoped, tag = 'internal scratch']
  %s0 = inlined_call_operand.vmem [shape: f32[2], index: 0, kind: input, shape index: {}]
  %s1 = inlined_call_operand.hbm [shape: f32[8,512], index: 1, kind: input, shape index: {}, may-alias: {1,3}]
  %s2 = inlined_call_operand.vmem [shape: u32[8,512], index: 2, kind: input, shape index: {}]
  %s3 = inlined_call_operand.hbm [shape: f32[8,512], index: 3, kind: output, shape index: {}, may-alias: {1,3}]
  %s4 = sld [smem:[#allocation0]]
  $region30: #{tpu_custom_call.1} parent=0
    _
  %s6 = ssub.s32 1, %s4
  %s7 = scalar_select 0, %s6, %s4
  $region1: #{tpu_custom_call.1} parent=0
    #allocation2 [shape = 'u8[512]{0}', space=smem, size = 0x200, scoped, tag = 'input window, operand 0, single buffered']
    #allocation3 [shape = 's32[1]{0}', space=sflag, size = 0x4, scoped, tag = 'scoped memory for tpu_custom_call.1']
    #allocation4 [shape = 's32[1]{0}', space=sflag, size = 0x4, scoped, tag = 'scoped memory for tpu_custom_call.1']
    #allocation5 [shape = 's32[1]{0}', space=sflag, size = 0x4, scoped, tag = 'scoped memory for tpu_custom_call.1']
    #allocation6 [shape = 'u8[16384]{0}', space=vmem, size = 0x4000, scoped, tag = 'input window, operand 1, single buffered']
    #allocation7 [shape = 'u8[16384]{0}', space=vmem, size = 0x4000, scoped, tag = 'output window, operand 0, single buffered']
    %8 = vsyncpa [#allocation5], 0
    %9 = vsyncpa [#allocation3], 0
    %10 = vsyncpa [#allocation4], 0
    // Predicated region
    $region2: #{tpu_custom_call.1} parent=1 // pred_check
      _
    $region3: #{tpu_custom_call.1} parent=1 // pred_check_branch
      %12 = sbr.rel (0) target = $region5
    $region4: #{tpu_custom_call.1} parent=1 // pred_region
      %14 = vsyncadd [#allocation5], 0
      %s16 = sshll.u32 %s0, 4
      %s17 = int_to_ptr.vmem [resolvable:$true] %s16
      %19 = dma.vmem_to_smem %s17, 16, [#allocation2], [#allocation5]
    $region5: #{tpu_custom_call.1} parent=1 // pred_fallthru
      _
    // Predicated region
    $region6: #{tpu_custom_call.1} parent=1 // pred_check
      _
    $region7: #{tpu_custom_call.1} parent=1 // pred_check_branch
      %21 = sbr.rel (0) target = $region9
    $region8: #{tpu_custom_call.1} parent=1 // pred_region
      %23 = vsyncadd [#allocation3], 0
      %s25 = sshll.u32 %s1, 4
      %s26 = int_to_ptr.hbm [resolvable:$true] %s25
      %s27 = sshll.u32 [#allocation6], 4
      %s28 = int_to_ptr.vmem [resolvable:$true] %s27
      %30 = dma.hbm_to_vmem [thread:$0]  %s26, 512, %s28, [#allocation3]
    $region9: #{tpu_custom_call.1} parent=1 // pred_fallthru
      _
    // Predicated region
    $region10: #{tpu_custom_call.1} parent=1 // pred_check
      _
    $region11: #{tpu_custom_call.1} parent=1 // pred_check_branch
      %32 = sbr.rel (0) target = $region13
    $region12: #{tpu_custom_call.1} parent=1 // pred_region
      _
    $region13: #{tpu_custom_call.1} parent=1 // pred_fallthru
      _
    // Predicated region
    $region14: #{tpu_custom_call.1} parent=1 // pred_check
      _
    $region15: #{tpu_custom_call.1} parent=1 // pred_check_branch
      %34 = sbr.rel (0) target = $region17
    $region16: #{tpu_custom_call.1} parent=1 // pred_region
      %36 = dma.done [#allocation5], 16
    $region17: #{tpu_custom_call.1} parent=1 // pred_fallthru
      _
    // Predicated region
    $region18: #{tpu_custom_call.1} parent=1 // pred_check
      _
    $region19: #{tpu_custom_call.1} parent=1 // pred_check_branch
      %38 = sbr.rel (0) target = $region21
    $region20: #{tpu_custom_call.1} parent=1 // pred_region
      %40 = dma.done [#allocation3], 512
    $region21: #{tpu_custom_call.1} parent=1 // pred_fallthru
      _
    %41 = sfence
    %s42 = sld [smem:[#allocation2]]
    %s43 = sld [smem:[#allocation2 + $0x1]]
    %v44 = vld [vmem:[#allocation6] sm:$0xff]
    %v45 = vld [vmem:[#allocation6 + $0x8] sm:$0xff]
    %v46 = vld [vmem:[#allocation6 + $0x10] sm:$0xff]
    %v47 = vld [vmem:[#allocation6 + $0x18] sm:$0xff]
    %v48 = vld [vmem:[%s2] sm:$0xff]
    %v49 = vld [vmem:[%s2 + $0x8] sm:$0xff]
    %v50 = vld [vmem:[%s2 + $0x10] sm:$0xff]
    %v51 = vld [vmem:[%s2 + $0x18] sm:$0xff]
    %v52 = vadd.s32 %v48, 2147483648
    %vm54 = vcmp.lt.s32.totalorder %v52, 2576980378
    %v55 = vadd.s32 %v49, 2147483648
    %vm57 = vcmp.lt.s32.totalorder %v55, 2576980378
    %v58 = vadd.s32 %v50, 2147483648
    %vm60 = vcmp.lt.s32.totalorder %v58, 2576980378
    %v61 = vadd.s32 %v51, 2147483648
    %vm63 = vcmp.lt.s32.totalorder %v61, 2576980378
    %v64 = vstv %s42
    %v65 = vsel %vm54, %v64, %v44
    %v66 = vsel %vm57, %v64, %v45
    %v67 = vsel %vm60, %v64, %v46
    %v68 = vsel %vm63, %v64, %v47
    %v69 = vadd.s32 %v48, 2147483648
    %vm71 = vcmp.gt.s32.totalorder %v69, 1717986918
    %v72 = vadd.s32 %v49, 2147483648
    %vm74 = vcmp.gt.s32.totalorder %v72, 1717986918
    %v75 = vadd.s32 %v50, 2147483648
    %vm77 = vcmp.gt.s32.totalorder %v75, 1717986918
    %v78 = vadd.s32 %v51, 2147483648
    %vm80 = vcmp.gt.s32.totalorder %v78, 1717986918
    %v81 = vstv %s43
    %v82 = vsel %vm71, %v81, %v65
    %v83 = vsel %vm74, %v81, %v66
    %v84 = vsel %vm77, %v81, %v67
    %v85 = vsel %vm80, %v81, %v68
    %86 = vst [vmem:[#allocation7] sm:$0xff] %v82
    %87 = vst [vmem:[#allocation7 + $0x8] sm:$0xff] %v83
    %88 = vst [vmem:[#allocation7 + $0x10] sm:$0xff] %v84
    %89 = vst [vmem:[#allocation7 + $0x18] sm:$0xff] %v85
    // Predicated region
    $region22: #{tpu_custom_call.1} parent=1 // pred_check
      _
    $region23: #{tpu_custom_call.1} parent=1 // pred_check_branch
      %91 = sbr.rel (0) target = $region25
    $region24: #{tpu_custom_call.1} parent=1 // pred_region
      %93 = vsyncadd [#allocation4], 0
      %s95 = sshll.u32 [#allocation7], 4
      %s96 = int_to_ptr.vmem [resolvable:$true] %s95
      %s97 = sshll.u32 %s3, 4
      %s98 = int_to_ptr.hbm [resolvable:$true] %s97
      %100 = dma.vmem_to_hbm [thread:$0]  %s96, 512, %s98, [#allocation4]
    $region25: #{tpu_custom_call.1} parent=1 // pred_fallthru
      _
    // Predicated region
    $region26: #{tpu_custom_call.1} parent=1 // pred_check
      _
    $region27: #{tpu_custom_call.1} parent=1 // pred_check_branch
      %102 = sbr.rel (0) target = $region29
    $region28: #{tpu_custom_call.1} parent=1 // pred_region
      %104 = dma.done [#allocation4], 512
    $region29: #{tpu_custom_call.1} parent=1 // pred_fallthru
      _
    %105 = vsyncpa [#allocation3], 1
    %106 = vsyncpa [#allocation4], 1
    %107 = vsyncpa [#allocation5], 1

</llo_original>
